<compile_context>
chip_gen: v5e
topology: v5e:2x2
jax: 0.10.0
libtpu: 0.0.40
codegen_flags: <defaults>
</compile_context>

<pallas_src>
import numpy as np
import jax
import jax.numpy as jnp
from jax.experimental import pallas as pl
from jax.experimental.pallas import tpu as pltpu


# ----------------------------- Pallas kernel ------------------------------

def make_lstm_linear_kernel(T, Bp, H, Vp):
    """Fused: pre-gates matmul -> T-step LSTM recurrence -> Linear head."""
    G = 4 * H

    def kernel(x_ref, wih_ref, wcomb_ref, b_ref, blin_ref, out_ref, pre_scr):
        # x_ref:     (T*Bp, E)     time-major embeddings, batch padded to Bp
        # wih_ref:   (E, 4H)       input->gates (pre-transposed, i/f/o * 0.5)
        # wcomb_ref: (H, 4H+Vp)    [W_hh (i/f/o * 0.5) | W_lin] fused RHS
        # b_ref:     (1, 4H)       (b_ih + b_hh), i/f/o * 0.5
        # blin_ref:  (1, Vp)
        # out_ref:   (T*Bp, Vp)
        # pre_scr:   (T*Bp, 4H)    hoisted input projection

        # Hoisted input projection: ONE well-shaped MXU call, bias folded in.
        pre_scr[...] = (
            jnp.dot(x_ref[...], wih_ref[...],
                    preferred_element_type=jnp.float32)
            + b_ref[...])

        blin = blin_ref[...]
        h = jnp.zeros((Bp, H), jnp.float32)
        c = jnp.zeros((Bp, H), jnp.float32)

        # T is small and static -> static unroll; h/c live in vregs, every
        # slice/store is static and (8,128)-aligned.
        for t in range(T):
            if t == 0:
                gates = pre_scr[pl.ds(0, Bp), :]            # h_{-1} == 0
            else:
                # Single 256-wide MXU call over the fused [W_hh | W_lin] RHS.
                comb = jnp.dot(h, wcomb_ref[...],
                               preferred_element_type=jnp.float32)  # (Bp,G+Vp)
                # logits of step t-1 are off the critical path: lane-dense store
                out_ref[pl.ds((t - 1) * Bp, Bp), :] = comb[:, G:] + blin
                gates = pre_scr[pl.ds(t * Bp, Bp), :] + comb[:, :G]
            # One full-width tanh over the 128-lane gates vreg; i/f/o columns
            # were pre-scaled by 0.5 so sigmoid(z) = 0.5*tanh(z/2) + 0.5 is a
            # cheap VPU fma (gate order: i, f, g, o).
            tt = jnp.tanh(gates)
            i = 0.5 * tt[:, 0:H] + 0.5
            f = 0.5 * tt[:, H:2 * H] + 0.5
            g = tt[:, 2 * H:3 * H]
            o = 0.5 * tt[:, 3 * H:4 * H] + 0.5
            c = f * c + i * g
            h = o * jnp.tanh(c)

        # Tail: logits for the final step (one small matmul).
        comb = jnp.dot(h, wcomb_ref[...], preferred_element_type=jnp.float32)
        out_ref[pl.ds((T - 1) * Bp, Bp), :] = comb[:, G:] + blin

    return kernel


# --------------------------- weight preparation -----------------------------

def prepare_weights(params):
    """One-time prep hoisted off the forward path: transposes, lane padding,
    W_hh || W_lin fusion, bias fold, and the 0.5 i/f/o gate scale that lets
    the kernel use a single tanh EUP pass per step."""
    emb, w_ih, w_hh, b_ih, b_hh, w_lin, b_lin = params
    E = w_ih.shape[1]
    H = w_hh.shape[1]
    Vout = w_lin.shape[0]
    Vp = ((Vout + 127) // 128) * 128
    G = 4 * H

    # PyTorch gate order [i, f, g, o]: scale i/f/o columns by 0.5.
    scale = jnp.concatenate([jnp.full((2 * H,), 0.5, jnp.float32),
                             jnp.ones((H,), jnp.float32),
                             jnp.full((H,), 0.5, jnp.float32)])

    wih_t = w_ih.T.astype(jnp.float32) * scale[None, :]              # (E, 4H)
    whh_t = w_hh.T.astype(jnp.float32) * scale[None, :]              # (H, 4H)
    bias = ((b_ih + b_hh).astype(jnp.float32) * scale).reshape(1, G)  # (1, 4H)

    wlin_pad = jnp.zeros((H, Vp), jnp.float32)
    wlin_pad = wlin_pad.at[:, :Vout].set(w_lin.T.astype(jnp.float32))
    blin_pad = jnp.zeros((1, Vp), jnp.float32)
    blin_pad = blin_pad.at[:, :Vout].set(b_lin.astype(jnp.float32))

    wcomb = jnp.concatenate([whh_t, wlin_pad], axis=1)               # (H, G+Vp)

    return dict(emb=emb.astype(jnp.float32), wih=wih_t, wcomb=wcomb,
                bias=bias, blin=blin_pad, E=E, H=H, Vout=Vout, Vp=Vp)


# ------------------------------- forward path --------------------------------

def lstm_linear_pallas(prepped, x_tbe):
    """x_tbe: (T, B, E) time-major embeddings. Returns (T, B, Vout) logits."""
    T, B, E = x_tbe.shape
    H, Vp, Vout = prepped['H'], prepped['Vp'], prepped['Vout']

    Bp = ((B + 7) // 8) * 8          # sublane-pad batch
    x_pad = jnp.zeros((T, Bp, E), jnp.float32)
    x_pad = x_pad.at[:, :B, :].set(x_tbe.astype(jnp.float32))
    x_flat = x_pad.reshape(T * Bp, E)

    kernel = make_lstm_linear_kernel(T, Bp, H, Vp)
    out_flat = pl.pallas_call(
        kernel,
        out_shape=jax.ShapeDtypeStruct((T * Bp, Vp), jnp.float32),
        in_specs=[pl.BlockSpec(memory_space=pltpu.MemorySpace.VMEM)] * 5,
        out_specs=pl.BlockSpec(memory_space=pltpu.MemorySpace.VMEM),
        scratch_shapes=[
            pltpu.VMEM((T * Bp, 4 * H), jnp.float32),   # pre-gates
        ],
    )(x_flat, prepped['wih'], prepped['wcomb'], prepped['bias'],
      prepped['blin'])

    return out_flat.reshape(T, Bp, Vp)[:, :B, :Vout]    # (T, B, Vout)


def packed_order(lengths_np):
    """Row order of pack_padded_sequence(batch_first=True, enforce_sorted=False):
       time-step-major over batches sorted by descending length."""
    order = np.argsort(-lengths_np, kind="stable")
    rows_t, rows_b = [], []
    for t in range(int(lengths_np.max())):
        for b in order:
            if lengths_np[b] > t:
                rows_t.append(t)
                rows_b.append(int(b))
    return np.array(rows_t), np.array(rows_b)


def rnn_forward(prepped, data, lengths_np):
    """Equivalent of RNN.forward(data, lengths): returns (sum(lengths), V-2)."""
    x = jnp.take(prepped['emb'], data, axis=0)          # (B, T, E) embedding lookup
    x_tbe = jnp.transpose(x, (1, 0, 2))                 # (T, B, E) time-major
    logits_tbv = lstm_linear_pallas(prepped, x_tbe)     # (T, B, V-2)
    rows_t, rows_b = packed_order(lengths_np)
    return logits_tbv[rows_t, rows_b]                   # packed-data ordering


# ------------------------------- module glue -------------------------------

def init_params(key, V, E, H):
    """Deterministic init mimicking the PyTorch module's parameter shapes."""
    ks = jax.random.split(key, 7)
    s = 1.0 / np.sqrt(H)
    emb = jax.random.normal(ks[0], (V, E), jnp.float32)
    emb = emb.at[V - 1].set(0.0)                        # padding_idx row
    w_ih = jax.random.uniform(ks[1], (4 * H, E), jnp.float32, -s, s)
    w_hh = jax.random.uniform(ks[2], (4 * H, H), jnp.float32, -s, s)
    b_ih = jax.random.uniform(ks[3], (4 * H,), jnp.float32, -s, s)
    b_hh = jax.random.uniform(ks[4], (4 * H,), jnp.float32, -s, s)
    w_lin = jax.random.uniform(ks[5], (V - 2, H), jnp.float32, -s, s)
    b_lin = jax.random.uniform(ks[6], (V - 2,), jnp.float32, -s, s)
    return emb, w_ih, w_hh, b_ih, b_hh, w_lin, b_lin


# ------------------------------- reference ---------------------------------

def rnn_reference(params, data, lengths_np):
    emb, w_ih, w_hh, b_ih, b_hh, w_lin, b_lin = params
    x = jnp.take(emb, data, axis=0)
    x_tbe = jnp.transpose(x, (1, 0, 2))
    T, B, E = x_tbe.shape
    H = w_hh.shape[1]
    h = jnp.zeros((B, H), jnp.float32)
    c = jnp.zeros((B, H), jnp.float32)
    outs = []
    for t in range(T):
        g = x_tbe[t] @ w_ih.T + h @ w_hh.T + b_ih + b_hh
        i = jax.nn.sigmoid(g[:, :H])
        f = jax.nn.sigmoid(g[:, H:2 * H])
        gg = jnp.tanh(g[:, 2 * H:3 * H])
        o = jax.nn.sigmoid(g[:, 3 * H:4 * H])
        c = f * c + i * gg
        h = o * jnp.tanh(c)
        outs.append(h @ w_lin.T + b_lin)
    logits_tbv = jnp.stack(outs)
    rows_t, rows_b = packed_order(lengths_np)
    return logits_tbv[rows_t, rows_b]


# --------------------------------- main -------------------------------------

if __name__ == "__main__":
    V, E, H = 16, 32, 32          # num_embeddings, embedding_dim/input_size, hidden_size
    B, T = 4, 8                   # batch, max sequence length

    key = jax.random.PRNGKey(0)
    k_param, k_data = jax.random.split(key)
    params = init_params(k_param, V, E, H)
    prepped = prepare_weights(params)       # one-time, off the forward path

    lengths_np = np.array([8, 5, 7, 3], dtype=np.int64)
    data = jax.random.randint(k_data, (B, T), 0, V - 1, dtype=jnp.int32)
    # pad beyond each sequence length with padding_idx = V - 1
    t_idx = jnp.arange(T)[None, :]
    data = jnp.where(t_idx < jnp.asarray(lengths_np)[:, None], data, V - 1)

    out = rnn_forward(prepped, data, lengths_np)
    out = jax.block_until_ready(out)

    ref = rnn_reference(params, data, lengths_np)
    assert out.shape == (int(lengths_np.sum()), V - 2), out.shape
    np.testing.assert_allclose(np.asarray(out), np.asarray(ref),
                               rtol=1e-5, atol=1e-5)
    print("KERNEL_OK")
</pallas_src>

<mosaic_0001>
module attributes {stable_mosaic.version = 11 : i64} {
  func.func @kernel(%arg0: memref<64x32xf32, #tpu.memory_space<vmem>>, %arg1: memref<32x128xf32, #tpu.memory_space<vmem>>, %arg2: memref<32x256xf32, #tpu.memory_space<vmem>>, %arg3: memref<1x128xf32, #tpu.memory_space<vmem>>, %arg4: memref<1x128xf32, #tpu.memory_space<vmem>>, %arg5: memref<64x128xf32, #tpu.memory_space<vmem>>, %arg6: memref<64x128xf32, #tpu.memory_space<vmem>>) attributes {dimension_semantics = [], scalar_prefetch = 0 : i64, scratch_operands = 1 : i64, tpu.core_type = #tpu.core_type<tc>} {
    %c0 = arith.constant 0 : index
    %c0_0 = arith.constant 0 : index
    %0 = vector.load %arg0[%c0, %c0_0] : memref<64x32xf32, #tpu.memory_space<vmem>>, vector<64x32xf32>
    %c0_1 = arith.constant 0 : index
    %c0_2 = arith.constant 0 : index
    %1 = vector.load %arg1[%c0_1, %c0_2] : memref<32x128xf32, #tpu.memory_space<vmem>>, vector<32x128xf32>
    %cst = arith.constant dense<0.000000e+00> : vector<64x128xf32>
    %2 = tpu.matmul %0, %1, %cst {dimension_numbers = #tpu.dot_dimension_numbers<[1], [0], [0], [1], [0, 0, 1, 1], [], []>} : vector<64x32xf32>, vector<32x128xf32>, vector<64x128xf32> -> vector<64x128xf32>
    %c0_3 = arith.constant 0 : index
    %c0_4 = arith.constant 0 : index
    %3 = vector.load %arg3[%c0_3, %c0_4] : memref<1x128xf32, #tpu.memory_space<vmem>>, vector<1x128xf32>
    %4 = vector.broadcast %3 : vector<1x128xf32> to vector<64x128xf32>
    %5 = arith.addf %2, %4 : vector<64x128xf32>
    %c0_5 = arith.constant 0 : index
    %c0_6 = arith.constant 0 : index
    %6 = vector.load %arg6[%c0_5, %c0_6] : memref<64x128xf32, #tpu.memory_space<vmem>>, vector<64x128xf32>
    tpu.vector_store %arg6[%c0_5, %c0_6], %5 {strides = array<i32>} : memref<64x128xf32, #tpu.memory_space<vmem>>, vector<64x128xf32>,
    %c0_7 = arith.constant 0 : index
    %c0_8 = arith.constant 0 : index
    %7 = vector.load %arg4[%c0_7, %c0_8] : memref<1x128xf32, #tpu.memory_space<vmem>>, vector<1x128xf32>
    %cst_9 = arith.constant 0.000000e+00 : f32
    %8 = vector.broadcast %cst_9 : f32 to vector<8x32xf32>
    %c0_10 = arith.constant 0 : index
    %c0_11 = arith.constant 0 : index
    %9 = vector.load %arg6[%c0_10, %c0_11] : memref<64x128xf32, #tpu.memory_space<vmem>>, vector<8x128xf32>
    %10 = math.tanh %9 : vector<8x128xf32>
    %11 = vector.extract_strided_slice %10 {offsets = [0, 0], sizes = [8, 32], strides = [1, 1]} : vector<8x128xf32> to vector<8x32xf32>
    %cst_12 = arith.constant 5.000000e-01 : f32
    %12 = vector.broadcast %cst_12 : f32 to vector<8x32xf32>
    %13 = arith.mulf %12, %11 : vector<8x32xf32>
    %cst_13 = arith.constant 5.000000e-01 : f32
    %14 = vector.broadcast %cst_13 : f32 to vector<8x32xf32>
    %15 = arith.addf %13, %14 : vector<8x32xf32>
    %16 = vector.extract_strided_slice %10 {offsets = [0, 32], sizes = [8, 32], strides = [1, 1]} : vector<8x128xf32> to vector<8x32xf32>
    %cst_14 = arith.constant 5.000000e-01 : f32
    %17 = vector.broadcast %cst_14 : f32 to vector<8x32xf32>
    %18 = arith.mulf %17, %16 : vector<8x32xf32>
    %cst_15 = arith.constant 5.000000e-01 : f32
    %19 = vector.broadcast %cst_15 : f32 to vector<8x32xf32>
    %20 = arith.addf %18, %19 : vector<8x32xf32>
    %21 = vector.extract_strided_slice %10 {offsets = [0, 64], sizes = [8, 32], strides = [1, 1]} : vector<8x128xf32> to vector<8x32xf32>
    %22 = vector.extract_strided_slice %10 {offsets = [0, 96], sizes = [8, 32], strides = [1, 1]} : vector<8x128xf32> to vector<8x32xf32>
    %cst_16 = arith.constant 5.000000e-01 : f32
    %23 = vector.broadcast %cst_16 : f32 to vector<8x32xf32>
    %24 = arith.mulf %23, %22 : vector<8x32xf32>
    %cst_17 = arith.constant 5.000000e-01 : f32
    %25 = vector.broadcast %cst_17 : f32 to vector<8x32xf32>
    %26 = arith.addf %24, %25 : vector<8x32xf32>
    %27 = arith.mulf %20, %8 : vector<8x32xf32>
    %28 = arith.mulf %15, %21 : vector<8x32xf32>
    %29 = arith.addf %27, %28 : vector<8x32xf32>
    %30 = math.tanh %29 : vector<8x32xf32>
    %31 = arith.mulf %26, %30 : vector<8x32xf32>
    %c0_18 = arith.constant 0 : index
    %c0_19 = arith.constant 0 : index
    %32 = vector.load %arg2[%c0_18, %c0_19] : memref<32x256xf32, #tpu.memory_space<vmem>>, vector<32x256xf32>
    %cst_20 = arith.constant dense<0.000000e+00> : vector<8x256xf32>
    %33 = tpu.matmul %31, %32, %cst_20 {dimension_numbers = #tpu.dot_dimension_numbers<[1], [0], [0], [1], [0, 0, 1, 1], [], []>} : vector<8x32xf32>, vector<32x256xf32>, vector<8x256xf32> -> vector<8x256xf32>
    %34 = vector.extract_strided_slice %33 {offsets = [0, 128], sizes = [8, 128], strides = [1, 1]} : vector<8x256xf32> to vector<8x128xf32>
    %35 = vector.broadcast %7 : vector<1x128xf32> to vector<8x128xf32>
    %36 = arith.addf %34, %35 : vector<8x128xf32>
    %c0_21 = arith.constant 0 : index
    %c0_22 = arith.constant 0 : index
    %37 = vector.load %arg5[%c0_21, %c0_22] : memref<64x128xf32, #tpu.memory_space<vmem>>, vector<8x128xf32>
    tpu.vector_store %arg5[%c0_21, %c0_22], %36 {strides = array<i32>} : memref<64x128xf32, #tpu.memory_space<vmem>>, vector<8x128xf32>,
    %c8 = arith.constant 8 : index
    %c0_23 = arith.constant 0 : index
    %38 = vector.load %arg6[%c8, %c0_23] : memref<64x128xf32, #tpu.memory_space<vmem>>, vector<8x128xf32>
    %39 = vector.extract_strided_slice %33 {offsets = [0, 0], sizes = [8, 128], strides = [1, 1]} : vector<8x256xf32> to vector<8x128xf32>
    %40 = arith.addf %38, %39 : vector<8x128xf32>
    %41 = math.tanh %40 : vector<8x128xf32>
    %42 = vector.extract_strided_slice %41 {offsets = [0, 0], sizes = [8, 32], strides = [1, 1]} : vector<8x128xf32> to vector<8x32xf32>
    %cst_24 = arith.constant 5.000000e-01 : f32
    %43 = vector.broadcast %cst_24 : f32 to vector<8x32xf32>
    %44 = arith.mulf %43, %42 : vector<8x32xf32>
    %cst_25 = arith.constant 5.000000e-01 : f32
    %45 = vector.broadcast %cst_25 : f32 to vector<8x32xf32>
    %46 = arith.addf %44, %45 : vector<8x32xf32>
    %47 = vector.extract_strided_slice %41 {offsets = [0, 32], sizes = [8, 32], strides = [1, 1]} : vector<8x128xf32> to vector<8x32xf32>
    %cst_26 = arith.constant 5.000000e-01 : f32
    %48 = vector.broadcast %cst_26 : f32 to vector<8x32xf32>
    %49 = arith.mulf %48, %47 : vector<8x32xf32>
    %cst_27 = arith.constant 5.000000e-01 : f32
    %50 = vector.broadcast %cst_27 : f32 to vector<8x32xf32>
    %51 = arith.addf %49, %50 : vector<8x32xf32>
    %52 = vector.extract_strided_slice %41 {offsets = [0, 64], sizes = [8, 32], strides = [1, 1]} : vector<8x128xf32> to vector<8x32xf32>
    %53 = vector.extract_strided_slice %41 {offsets = [0, 96], sizes = [8, 32], strides = [1, 1]} : vector<8x128xf32> to vector<8x32xf32>
    %cst_28 = arith.constant 5.000000e-01 : f32
    %54 = vector.broadcast %cst_28 : f32 to vector<8x32xf32>
    %55 = arith.mulf %54, %53 : vector<8x32xf32>
    %cst_29 = arith.constant 5.000000e-01 : f32
    %56 = vector.broadcast %cst_29 : f32 to vector<8x32xf32>
    %57 = arith.addf %55, %56 : vector<8x32xf32>
    %58 = arith.mulf %51, %29 : vector<8x32xf32>
    %59 = arith.mulf %46, %52 : vector<8x32xf32>
    %60 = arith.addf %58, %59 : vector<8x32xf32>
    %61 = math.tanh %60 : vector<8x32xf32>
    %62 = arith.mulf %57, %61 : vector<8x32xf32>
    %c0_30 = arith.constant 0 : index
    %c0_31 = arith.constant 0 : index
    %63 = vector.load %arg2[%c0_30, %c0_31] : memref<32x256xf32, #tpu.memory_space<vmem>>, vector<32x256xf32>
    %cst_32 = arith.constant dense<0.000000e+00> : vector<8x256xf32>
    %64 = tpu.matmul %62, %63, %cst_32 {dimension_numbers = #tpu.dot_dimension_numbers<[1], [0], [0], [1], [0, 0, 1, 1], [], []>} : vector<8x32xf32>, vector<32x256xf32>, vector<8x256xf32> -> vector<8x256xf32>
    %65 = vector.extract_strided_slice %64 {offsets = [0, 128], sizes = [8, 128], strides = [1, 1]} : vector<8x256xf32> to vector<8x128xf32>
    %66 = vector.broadcast %7 : vector<1x128xf32> to vector<8x128xf32>
    %67 = arith.addf %65, %66 : vector<8x128xf32>
    %c8_33 = arith.constant 8 : index
    %c0_34 = arith.constant 0 : index
    %68 = vector.load %arg5[%c8_33, %c0_34] : memref<64x128xf32, #tpu.memory_space<vmem>>, vector<8x128xf32>
    tpu.vector_store %arg5[%c8_33, %c0_34], %67 {strides = array<i32>} : memref<64x128xf32, #tpu.memory_space<vmem>>, vector<8x128xf32>,
    %c16 = arith.constant 16 : index
    %c0_35 = arith.constant 0 : index
    %69 = vector.load %arg6[%c16, %c0_35] : memref<64x128xf32, #tpu.memory_space<vmem>>, vector<8x128xf32>
    %70 = vector.extract_strided_slice %64 {offsets = [0, 0], sizes = [8, 128], strides = [1, 1]} : vector<8x256xf32> to vector<8x128xf32>
    %71 = arith.addf %69, %70 : vector<8x128xf32>
    %72 = math.tanh %71 : vector<8x128xf32>
    %73 = vector.extract_strided_slice %72 {offsets = [0, 0], sizes = [8, 32], strides = [1, 1]} : vector<8x128xf32> to vector<8x32xf32>
    %cst_36 = arith.constant 5.000000e-01 : f32
    %74 = vector.broadcast %cst_36 : f32 to vector<8x32xf32>
    %75 = arith.mulf %74, %73 : vector<8x32xf32>
    %cst_37 = arith.constant 5.000000e-01 : f32
    %76 = vector.broadcast %cst_37 : f32 to vector<8x32xf32>
    %77 = arith.addf %75, %76 : vector<8x32xf32>
    %78 = vector.extract_strided_slice %72 {offsets = [0, 32], sizes = [8, 32], strides = [1, 1]} : vector<8x128xf32> to vector<8x32xf32>
    %cst_38 = arith.constant 5.000000e-01 : f32
    %79 = vector.broadcast %cst_38 : f32 to vector<8x32xf32>
    %80 = arith.mulf %79, %78 : vector<8x32xf32>
    %cst_39 = arith.constant 5.000000e-01 : f32
    %81 = vector.broadcast %cst_39 : f32 to vector<8x32xf32>
    %82 = arith.addf %80, %81 : vector<8x32xf32>
    %83 = vector.extract_strided_slice %72 {offsets = [0, 64], sizes = [8, 32], strides = [1, 1]} : vector<8x128xf32> to vector<8x32xf32>
    %84 = vector.extract_strided_slice %72 {offsets = [0, 96], sizes = [8, 32], strides = [1, 1]} : vector<8x128xf32> to vector<8x32xf32>
    %cst_40 = arith.constant 5.000000e-01 : f32
    %85 = vector.broadcast %cst_40 : f32 to vector<8x32xf32>
    %86 = arith.mulf %85, %84 : vector<8x32xf32>
    %cst_41 = arith.constant 5.000000e-01 : f32
    %87 = vector.broadcast %cst_41 : f32 to vector<8x32xf32>
    %88 = arith.addf %86, %87 : vector<8x32xf32>
    %89 = arith.mulf %82, %60 : vector<8x32xf32>
    %90 = arith.mulf %77, %83 : vector<8x32xf32>
    %91 = arith.addf %89, %90 : vector<8x32xf32>
    %92 = math.tanh %91 : vector<8x32xf32>
    %93 = arith.mulf %88, %92 : vector<8x32xf32>
    %c0_42 = arith.constant 0 : index
    %c0_43 = arith.constant 0 : index
    %94 = vector.load %arg2[%c0_42, %c0_43] : memref<32x256xf32, #tpu.memory_space<vmem>>, vector<32x256xf32>
    %cst_44 = arith.constant dense<0.000000e+00> : vector<8x256xf32>
    %95 = tpu.matmul %93, %94, %cst_44 {dimension_numbers = #tpu.dot_dimension_numbers<[1], [0], [0], [1], [0, 0, 1, 1], [], []>} : vector<8x32xf32>, vector<32x256xf32>, vector<8x256xf32> -> vector<8x256xf32>
    %96 = vector.extract_strided_slice %95 {offsets = [0, 128], sizes = [8, 128], strides = [1, 1]} : vector<8x256xf32> to vector<8x128xf32>
    %97 = vector.broadcast %7 : vector<1x128xf32> to vector<8x128xf32>
    %98 = arith.addf %96, %97 : vector<8x128xf32>
    %c16_45 = arith.constant 16 : index
    %c0_46 = arith.constant 0 : index
    %99 = vector.load %arg5[%c16_45, %c0_46] : memref<64x128xf32, #tpu.memory_space<vmem>>, vector<8x128xf32>
    tpu.vector_store %arg5[%c16_45, %c0_46], %98 {strides = array<i32>} : memref<64x128xf32, #tpu.memory_space<vmem>>, vector<8x128xf32>,
    %c24 = arith.constant 24 : index
    %c0_47 = arith.constant 0 : index
    %100 = vector.load %arg6[%c24, %c0_47] : memref<64x128xf32, #tpu.memory_space<vmem>>, vector<8x128xf32>
    %101 = vector.extract_strided_slice %95 {offsets = [0, 0], sizes = [8, 128], strides = [1, 1]} : vector<8x256xf32> to vector<8x128xf32>
    %102 = arith.addf %100, %101 : vector<8x128xf32>
    %103 = math.tanh %102 : vector<8x128xf32>
    %104 = vector.extract_strided_slice %103 {offsets = [0, 0], sizes = [8, 32], strides = [1, 1]} : vector<8x128xf32> to vector<8x32xf32>
    %cst_48 = arith.constant 5.000000e-01 : f32
    %105 = vector.broadcast %cst_48 : f32 to vector<8x32xf32>
    %106 = arith.mulf %105, %104 : vector<8x32xf32>
    %cst_49 = arith.constant 5.000000e-01 : f32
    %107 = vector.broadcast %cst_49 : f32 to vector<8x32xf32>
    %108 = arith.addf %106, %107 : vector<8x32xf32>
    %109 = vector.extract_strided_slice %103 {offsets = [0, 32], sizes = [8, 32], strides = [1, 1]} : vector<8x128xf32> to vector<8x32xf32>
    %cst_50 = arith.constant 5.000000e-01 : f32
    %110 = vector.broadcast %cst_50 : f32 to vector<8x32xf32>
    %111 = arith.mulf %110, %109 : vector<8x32xf32>
    %cst_51 = arith.constant 5.000000e-01 : f32
    %112 = vector.broadcast %cst_51 : f32 to vector<8x32xf32>
    %113 = arith.addf %111, %112 : vector<8x32xf32>
    %114 = vector.extract_strided_slice %103 {offsets = [0, 64], sizes = [8, 32], strides = [1, 1]} : vector<8x128xf32> to vector<8x32xf32>
    %115 = vector.extract_strided_slice %103 {offsets = [0, 96], sizes = [8, 32], strides = [1, 1]} : vector<8x128xf32> to vector<8x32xf32>
    %cst_52 = arith.constant 5.000000e-01 : f32
    %116 = vector.broadcast %cst_52 : f32 to vector<8x32xf32>
    %117 = arith.mulf %116, %115 : vector<8x32xf32>
    %cst_53 = arith.constant 5.000000e-01 : f32
    %118 = vector.broadcast %cst_53 : f32 to vector<8x32xf32>
    %119 = arith.addf %117, %118 : vector<8x32xf32>
    %120 = arith.mulf %113, %91 : vector<8x32xf32>
    %121 = arith.mulf %108, %114 : vector<8x32xf32>
    %122 = arith.addf %120, %121 : vector<8x32xf32>
    %123 = math.tanh %122 : vector<8x32xf32>
    %124 = arith.mulf %119, %123 : vector<8x32xf32>
    %c0_54 = arith.constant 0 : index
    %c0_55 = arith.constant 0 : index
    %125 = vector.load %arg2[%c0_54, %c0_55] : memref<32x256xf32, #tpu.memory_space<vmem>>, vector<32x256xf32>
    %cst_56 = arith.constant dense<0.000000e+00> : vector<8x256xf32>
    %126 = tpu.matmul %124, %125, %cst_56 {dimension_numbers = #tpu.dot_dimension_numbers<[1], [0], [0], [1], [0, 0, 1, 1], [], []>} : vector<8x32xf32>, vector<32x256xf32>, vector<8x256xf32> -> vector<8x256xf32>
    %127 = vector.extract_strided_slice %126 {offsets = [0, 128], sizes = [8, 128], strides = [1, 1]} : vector<8x256xf32> to vector<8x128xf32>
    %128 = vector.broadcast %7 : vector<1x128xf32> to vector<8x128xf32>
    %129 = arith.addf %127, %128 : vector<8x128xf32>
    %c24_57 = arith.constant 24 : index
    %c0_58 = arith.constant 0 : index
    %130 = vector.load %arg5[%c24_57, %c0_58] : memref<64x128xf32, #tpu.memory_space<vmem>>, vector<8x128xf32>
    tpu.vector_store %arg5[%c24_57, %c0_58], %129 {strides = array<i32>} : memref<64x128xf32, #tpu.memory_space<vmem>>, vector<8x128xf32>,
    %c32 = arith.constant 32 : index
    %c0_59 = arith.constant 0 : index
    %131 = vector.load %arg6[%c32, %c0_59] : memref<64x128xf32, #tpu.memory_space<vmem>>, vector<8x128xf32>
    %132 = vector.extract_strided_slice %126 {offsets = [0, 0], sizes = [8, 128], strides = [1, 1]} : vector<8x256xf32> to vector<8x128xf32>
    %133 = arith.addf %131, %132 : vector<8x128xf32>
    %134 = math.tanh %133 : vector<8x128xf32>
    %135 = vector.extract_strided_slice %134 {offsets = [0, 0], sizes = [8, 32], strides = [1, 1]} : vector<8x128xf32> to vector<8x32xf32>
    %cst_60 = arith.constant 5.000000e-01 : f32
    %136 = vector.broadcast %cst_60 : f32 to vector<8x32xf32>
    %137 = arith.mulf %136, %135 : vector<8x32xf32>
    %cst_61 = arith.constant 5.000000e-01 : f32
    %138 = vector.broadcast %cst_61 : f32 to vector<8x32xf32>
    %139 = arith.addf %137, %138 : vector<8x32xf32>
    %140 = vector.extract_strided_slice %134 {offsets = [0, 32], sizes = [8, 32], strides = [1, 1]} : vector<8x128xf32> to vector<8x32xf32>
    %cst_62 = arith.constant 5.000000e-01 : f32
    %141 = vector.broadcast %cst_62 : f32 to vector<8x32xf32>
    %142 = arith.mulf %141, %140 : vector<8x32xf32>
    %cst_63 = arith.constant 5.000000e-01 : f32
    %143 = vector.broadcast %cst_63 : f32 to vector<8x32xf32>
    %144 = arith.addf %142, %143 : vector<8x32xf32>
    %145 = vector.extract_strided_slice %134 {offsets = [0, 64], sizes = [8, 32], strides = [1, 1]} : vector<8x128xf32> to vector<8x32xf32>
    %146 = vector.extract_strided_slice %134 {offsets = [0, 96], sizes = [8, 32], strides = [1, 1]} : vector<8x128xf32> to vector<8x32xf32>
    %cst_64 = arith.constant 5.000000e-01 : f32
    %147 = vector.broadcast %cst_64 : f32 to vector<8x32xf32>
    %148 = arith.mulf %147, %146 : vector<8x32xf32>
    %cst_65 = arith.constant 5.000000e-01 : f32
    %149 = vector.broadcast %cst_65 : f32 to vector<8x32xf32>
    %150 = arith.addf %148, %149 : vector<8x32xf32>
    %151 = arith.mulf %144, %122 : vector<8x32xf32>
    %152 = arith.mulf %139, %145 : vector<8x32xf32>
    %153 = arith.addf %151, %152 : vector<8x32xf32>
    %154 = math.tanh %153 : vector<8x32xf32>
    %155 = arith.mulf %150, %154 : vector<8x32xf32>
    %c0_66 = arith.constant 0 : index
    %c0_67 = arith.constant 0 : index
    %156 = vector.load %arg2[%c0_66, %c0_67] : memref<32x256xf32, #tpu.memory_space<vmem>>, vector<32x256xf32>
    %cst_68 = arith.constant dense<0.000000e+00> : vector<8x256xf32>
    %157 = tpu.matmul %155, %156, %cst_68 {dimension_numbers = #tpu.dot_dimension_numbers<[1], [0], [0], [1], [0, 0, 1, 1], [], []>} : vector<8x32xf32>, vector<32x256xf32>, vector<8x256xf32> -> vector<8x256xf32>
    %158 = vector.extract_strided_slice %157 {offsets = [0, 128], sizes = [8, 128], strides = [1, 1]} : vector<8x256xf32> to vector<8x128xf32>
    %159 = vector.broadcast %7 : vector<1x128xf32> to vector<8x128xf32>
    %160 = arith.addf %158, %159 : vector<8x128xf32>
    %c32_69 = arith.constant 32 : index
    %c0_70 = arith.constant 0 : index
    %161 = vector.load %arg5[%c32_69, %c0_70] : memref<64x128xf32, #tpu.memory_space<vmem>>, vector<8x128xf32>
    tpu.vector_store %arg5[%c32_69, %c0_70], %160 {strides = array<i32>} : memref<64x128xf32, #tpu.memory_space<vmem>>, vector<8x128xf32>,
    %c40 = arith.constant 40 : index
    %c0_71 = arith.constant 0 : index
    %162 = vector.load %arg6[%c40, %c0_71] : memref<64x128xf32, #tpu.memory_space<vmem>>, vector<8x128xf32>
    %163 = vector.extract_strided_slice %157 {offsets = [0, 0], sizes = [8, 128], strides = [1, 1]} : vector<8x256xf32> to vector<8x128xf32>
    %164 = arith.addf %162, %163 : vector<8x128xf32>
    %165 = math.tanh %164 : vector<8x128xf32>
    %166 = vector.extract_strided_slice %165 {offsets = [0, 0], sizes = [8, 32], strides = [1, 1]} : vector<8x128xf32> to vector<8x32xf32>
    %cst_72 = arith.constant 5.000000e-01 : f32
    %167 = vector.broadcast %cst_72 : f32 to vector<8x32xf32>
    %168 = arith.mulf %167, %166 : vector<8x32xf32>
    %cst_73 = arith.constant 5.000000e-01 : f32
    %169 = vector.broadcast %cst_73 : f32 to vector<8x32xf32>
    %170 = arith.addf %168, %169 : vector<8x32xf32>
    %171 = vector.extract_strided_slice %165 {offsets = [0, 32], sizes = [8, 32], strides = [1, 1]} : vector<8x128xf32> to vector<8x32xf32>
    %cst_74 = arith.constant 5.000000e-01 : f32
    %172 = vector.broadcast %cst_74 : f32 to vector<8x32xf32>
    %173 = arith.mulf %172, %171 : vector<8x32xf32>
    %cst_75 = arith.constant 5.000000e-01 : f32
    %174 = vector.broadcast %cst_75 : f32 to vector<8x32xf32>
    %175 = arith.addf %173, %174 : vector<8x32xf32>
    %176 = vector.extract_strided_slice %165 {offsets = [0, 64], sizes = [8, 32], strides = [1, 1]} : vector<8x128xf32> to vector<8x32xf32>
    %177 = vector.extract_strided_slice %165 {offsets = [0, 96], sizes = [8, 32], strides = [1, 1]} : vector<8x128xf32> to vector<8x32xf32>
    %cst_76 = arith.constant 5.000000e-01 : f32
    %178 = vector.broadcast %cst_76 : f32 to vector<8x32xf32>
    %179 = arith.mulf %178, %177 : vector<8x32xf32>
    %cst_77 = arith.constant 5.000000e-01 : f32
    %180 = vector.broadcast %cst_77 : f32 to vector<8x32xf32>
    %181 = arith.addf %179, %180 : vector<8x32xf32>
    %182 = arith.mulf %175, %153 : vector<8x32xf32>
    %183 = arith.mulf %170, %176 : vector<8x32xf32>
    %184 = arith.addf %182, %183 : vector<8x32xf32>
    %185 = math.tanh %184 : vector<8x32xf32>
    %186 = arith.mulf %181, %185 : vector<8x32xf32>
    %c0_78 = arith.constant 0 : index
    %c0_79 = arith.constant 0 : index
    %187 = vector.load %arg2[%c0_78, %c0_79] : memref<32x256xf32, #tpu.memory_space<vmem>>, vector<32x256xf32>
    %cst_80 = arith.constant dense<0.000000e+00> : vector<8x256xf32>
    %188 = tpu.matmul %186, %187, %cst_80 {dimension_numbers = #tpu.dot_dimension_numbers<[1], [0], [0], [1], [0, 0, 1, 1], [], []>} : vector<8x32xf32>, vector<32x256xf32>, vector<8x256xf32> -> vector<8x256xf32>
    %189 = vector.extract_strided_slice %188 {offsets = [0, 128], sizes = [8, 128], strides = [1, 1]} : vector<8x256xf32> to vector<8x128xf32>
    %190 = vector.broadcast %7 : vector<1x128xf32> to vector<8x128xf32>
    %191 = arith.addf %189, %190 : vector<8x128xf32>
    %c40_81 = arith.constant 40 : index
    %c0_82 = arith.constant 0 : index
    %192 = vector.load %arg5[%c40_81, %c0_82] : memref<64x128xf32, #tpu.memory_space<vmem>>, vector<8x128xf32>
    tpu.vector_store %arg5[%c40_81, %c0_82], %191 {strides = array<i32>} : memref<64x128xf32, #tpu.memory_space<vmem>>, vector<8x128xf32>,
    %c48 = arith.constant 48 : index
    %c0_83 = arith.constant 0 : index
    %193 = vector.load %arg6[%c48, %c0_83] : memref<64x128xf32, #tpu.memory_space<vmem>>, vector<8x128xf32>
    %194 = vector.extract_strided_slice %188 {offsets = [0, 0], sizes = [8, 128], strides = [1, 1]} : vector<8x256xf32> to vector<8x128xf32>
    %195 = arith.addf %193, %194 : vector<8x128xf32>
    %196 = math.tanh %195 : vector<8x128xf32>
    %197 = vector.extract_strided_slice %196 {offsets = [0, 0], sizes = [8, 32], strides = [1, 1]} : vector<8x128xf32> to vector<8x32xf32>
    %cst_84 = arith.constant 5.000000e-01 : f32
    %198 = vector.broadcast %cst_84 : f32 to vector<8x32xf32>
    %199 = arith.mulf %198, %197 : vector<8x32xf32>
    %cst_85 = arith.constant 5.000000e-01 : f32
    %200 = vector.broadcast %cst_85 : f32 to vector<8x32xf32>
    %201 = arith.addf %199, %200 : vector<8x32xf32>
    %202 = vector.extract_strided_slice %196 {offsets = [0, 32], sizes = [8, 32], strides = [1, 1]} : vector<8x128xf32> to vector<8x32xf32>
    %cst_86 = arith.constant 5.000000e-01 : f32
    %203 = vector.broadcast %cst_86 : f32 to vector<8x32xf32>
    %204 = arith.mulf %203, %202 : vector<8x32xf32>
    %cst_87 = arith.constant 5.000000e-01 : f32
    %205 = vector.broadcast %cst_87 : f32 to vector<8x32xf32>
    %206 = arith.addf %204, %205 : vector<8x32xf32>
    %207 = vector.extract_strided_slice %196 {offsets = [0, 64], sizes = [8, 32], strides = [1, 1]} : vector<8x128xf32> to vector<8x32xf32>
    %208 = vector.extract_strided_slice %196 {offsets = [0, 96], sizes = [8, 32], strides = [1, 1]} : vector<8x128xf32> to vector<8x32xf32>
    %cst_88 = arith.constant 5.000000e-01 : f32
    %209 = vector.broadcast %cst_88 : f32 to vector<8x32xf32>
    %210 = arith.mulf %209, %208 : vector<8x32xf32>
    %cst_89 = arith.constant 5.000000e-01 : f32
    %211 = vector.broadcast %cst_89 : f32 to vector<8x32xf32>
    %212 = arith.addf %210, %211 : vector<8x32xf32>
    %213 = arith.mulf %206, %184 : vector<8x32xf32>
    %214 = arith.mulf %201, %207 : vector<8x32xf32>
    %215 = arith.addf %213, %214 : vector<8x32xf32>
    %216 = math.tanh %215 : vector<8x32xf32>
    %217 = arith.mulf %212, %216 : vector<8x32xf32>
    %c0_90 = arith.constant 0 : index
    %c0_91 = arith.constant 0 : index
    %218 = vector.load %arg2[%c0_90, %c0_91] : memref<32x256xf32, #tpu.memory_space<vmem>>, vector<32x256xf32>
    %cst_92 = arith.constant dense<0.000000e+00> : vector<8x256xf32>
    %219 = tpu.matmul %217, %218, %cst_92 {dimension_numbers = #tpu.dot_dimension_numbers<[1], [0], [0], [1], [0, 0, 1, 1], [], []>} : vector<8x32xf32>, vector<32x256xf32>, vector<8x256xf32> -> vector<8x256xf32>
    %220 = vector.extract_strided_slice %219 {offsets = [0, 128], sizes = [8, 128], strides = [1, 1]} : vector<8x256xf32> to vector<8x128xf32>
    %221 = vector.broadcast %7 : vector<1x128xf32> to vector<8x128xf32>
    %222 = arith.addf %220, %221 : vector<8x128xf32>
    %c48_93 = arith.constant 48 : index
    %c0_94 = arith.constant 0 : index
    %223 = vector.load %arg5[%c48_93, %c0_94] : memref<64x128xf32, #tpu.memory_space<vmem>>, vector<8x128xf32>
    tpu.vector_store %arg5[%c48_93, %c0_94], %222 {strides = array<i32>} : memref<64x128xf32, #tpu.memory_space<vmem>>, vector<8x128xf32>,
    %c56 = arith.constant 56 : index
    %c0_95 = arith.constant 0 : index
    %224 = vector.load %arg6[%c56, %c0_95] : memref<64x128xf32, #tpu.memory_space<vmem>>, vector<8x128xf32>
    %225 = vector.extract_strided_slice %219 {offsets = [0, 0], sizes = [8, 128], strides = [1, 1]} : vector<8x256xf32> to vector<8x128xf32>
    %226 = arith.addf %224, %225 : vector<8x128xf32>
    %227 = math.tanh %226 : vector<8x128xf32>
    %228 = vector.extract_strided_slice %227 {offsets = [0, 0], sizes = [8, 32], strides = [1, 1]} : vector<8x128xf32> to vector<8x32xf32>
    %cst_96 = arith.constant 5.000000e-01 : f32
    %229 = vector.broadcast %cst_96 : f32 to vector<8x32xf32>
    %230 = arith.mulf %229, %228 : vector<8x32xf32>
    %cst_97 = arith.constant 5.000000e-01 : f32
    %231 = vector.broadcast %cst_97 : f32 to vector<8x32xf32>
    %232 = arith.addf %230, %231 : vector<8x32xf32>
    %233 = vector.extract_strided_slice %227 {offsets = [0, 32], sizes = [8, 32], strides = [1, 1]} : vector<8x128xf32> to vector<8x32xf32>
    %cst_98 = arith.constant 5.000000e-01 : f32
    %234 = vector.broadcast %cst_98 : f32 to vector<8x32xf32>
    %235 = arith.mulf %234, %233 : vector<8x32xf32>
    %cst_99 = arith.constant 5.000000e-01 : f32
    %236 = vector.broadcast %cst_99 : f32 to vector<8x32xf32>
    %237 = arith.addf %235, %236 : vector<8x32xf32>
    %238 = vector.extract_strided_slice %227 {offsets = [0, 64], sizes = [8, 32], strides = [1, 1]} : vector<8x128xf32> to vector<8x32xf32>
    %239 = vector.extract_strided_slice %227 {offsets = [0, 96], sizes = [8, 32], strides = [1, 1]} : vector<8x128xf32> to vector<8x32xf32>
    %cst_100 = arith.constant 5.000000e-01 : f32
    %240 = vector.broadcast %cst_100 : f32 to vector<8x32xf32>
    %241 = arith.mulf %240, %239 : vector<8x32xf32>
    %cst_101 = arith.constant 5.000000e-01 : f32
    %242 = vector.broadcast %cst_101 : f32 to vector<8x32xf32>
    %243 = arith.addf %241, %242 : vector<8x32xf32>
    %244 = arith.mulf %237, %215 : vector<8x32xf32>
    %245 = arith.mulf %232, %238 : vector<8x32xf32>
    %246 = arith.addf %244, %245 : vector<8x32xf32>
    %247 = math.tanh %246 : vector<8x32xf32>
    %248 = arith.mulf %243, %247 : vector<8x32xf32>
    %c0_102 = arith.constant 0 : index
    %c0_103 = arith.constant 0 : index
    %249 = vector.load %arg2[%c0_102, %c0_103] : memref<32x256xf32, #tpu.memory_space<vmem>>, vector<32x256xf32>
    %cst_104 = arith.constant dense<0.000000e+00> : vector<8x256xf32>
    %250 = tpu.matmul %248, %249, %cst_104 {dimension_numbers = #tpu.dot_dimension_numbers<[1], [0], [0], [1], [0, 0, 1, 1], [], []>} : vector<8x32xf32>, vector<32x256xf32>, vector<8x256xf32> -> vector<8x256xf32>
    %251 = vector.extract_strided_slice %250 {offsets = [0, 128], sizes = [8, 128], strides = [1, 1]} : vector<8x256xf32> to vector<8x128xf32>
    %252 = vector.broadcast %7 : vector<1x128xf32> to vector<8x128xf32>
    %253 = arith.addf %251, %252 : vector<8x128xf32>
    %c56_105 = arith.constant 56 : index
    %c0_106 = arith.constant 0 : index
    %254 = vector.load %arg5[%c56_105, %c0_106] : memref<64x128xf32, #tpu.memory_space<vmem>>, vector<8x128xf32>
    tpu.vector_store %arg5[%c56_105, %c0_106], %253 {strides = array<i32>} : memref<64x128xf32, #tpu.memory_space<vmem>>, vector<8x128xf32>,
    return
  }
}

</mosaic_0001>

<llo_original>
// kernel: tpu_custom_call.1
$region0: #{tpu_custom_call.1}
  #allocation0 [shape = 'u32[]', space=smem, size = 0x4, offset = 0x4, fixed_abs, tag = 'smem constant byte address 0x4 - core index']
  #allocation1 [shape = 'u32[72,128]{1,0:T(1,128)}', space=vmem, size = 0x9000, scoped, tag = 'internal scratch']
  #allocation2 [shape = 'f32[64,128]{1,0:T(8,128)}', space=vmem, size = 0x8000, scoped, tag = 'scratch operand']
  %s0 = inlined_call_operand.vmem [shape: f32[64,32], index: 0, kind: input, shape index: {}]
  %s1 = inlined_call_operand.vmem [shape: f32[32,128], index: 1, kind: input, shape index: {}]
  %s2 = inlined_call_operand.vmem [shape: f32[32,256], index: 2, kind: input, shape index: {}]
  %s3 = inlined_call_operand.vmem [shape: f32[1,128], index: 3, kind: input, shape index: {}]
  %s4 = inlined_call_operand.vmem [shape: f32[1,128], index: 4, kind: input, shape index: {}]
  %s5 = inlined_call_operand.hbm [shape: f32[64,128], index: 5, kind: output, shape index: {}]
  %s6 = sld [smem:[#allocation0]]
  $region30: #{tpu_custom_call.1} parent=0
    _
  %s8 = ssub.s32 1, %s6
  %s9 = scalar_select 0, %s8, %s6
  $region1: #{tpu_custom_call.1} parent=0
    #allocation3 [shape = 'u8[32768]{0}', space=vmem, size = 0x8000, scoped, tag = 'output window, operand 0, single buffered']
    #allocation4 [shape = 's32[1]{0}', space=sflag, size = 0x4, scoped, tag = 'scoped memory for tpu_custom_call.1']
    %10 = vsyncpa [#allocation4], 0
    // Predicated region
    $region2: #{tpu_custom_call.1} parent=1 // pred_check
      _
    $region3: #{tpu_custom_call.1} parent=1 // pred_check_branch
      %12 = sbr.rel (0) target = $region5
    $region4: #{tpu_custom_call.1} parent=1 // pred_region
      _
    $region5: #{tpu_custom_call.1} parent=1 // pred_fallthru
      _
    // Predicated region
    $region6: #{tpu_custom_call.1} parent=1 // pred_check
      _
    $region7: #{tpu_custom_call.1} parent=1 // pred_check_branch
      %14 = sbr.rel (0) target = $region9
    $region8: #{tpu_custom_call.1} parent=1 // pred_region
      _
    $region9: #{tpu_custom_call.1} parent=1 // pred_fallthru
      _
    // Predicated region
    $region10: #{tpu_custom_call.1} parent=1 // pred_check
      _
    $region11: #{tpu_custom_call.1} parent=1 // pred_check_branch
      %16 = sbr.rel (0) target = $region13
    $region12: #{tpu_custom_call.1} parent=1 // pred_region
      _
    $region13: #{tpu_custom_call.1} parent=1 // pred_fallthru
      _
    // Predicated region
    $region14: #{tpu_custom_call.1} parent=1 // pred_check
      _
    $region15: #{tpu_custom_call.1} parent=1 // pred_check_branch
      %18 = sbr.rel (0) target = $region17
    $region16: #{tpu_custom_call.1} parent=1 // pred_region
      _
    $region17: #{tpu_custom_call.1} parent=1 // pred_fallthru
      _
    // Predicated region
    $region18: #{tpu_custom_call.1} parent=1 // pred_check
      _
    $region19: #{tpu_custom_call.1} parent=1 // pred_check_branch
      %20 = sbr.rel (0) target = $region21
    $region20: #{tpu_custom_call.1} parent=1 // pred_region
      _
    $region21: #{tpu_custom_call.1} parent=1 // pred_fallthru
      _
    %v21 = vld [vmem:[%s0] sm:$0xff]
    %v22 = vld [vmem:[%s0 + $0x8] sm:$0xff]
    %v23 = vld [vmem:[%s0 + $0x10] sm:$0xff]
    %v24 = vld [vmem:[%s0 + $0x18] sm:$0xff]
    %v25 = vld [vmem:[%s0 + $0x20] sm:$0xff]
    %v26 = vld [vmem:[%s0 + $0x28] sm:$0xff]
    %v27 = vld [vmem:[%s0 + $0x30] sm:$0xff]
    %v28 = vld [vmem:[%s0 + $0x38] sm:$0xff]
    %v29 = vld [vmem:[%s1] sm:$0xff]
    %v30 = vld [vmem:[%s1 + $0x8] sm:$0xff]
    %v31 = vld [vmem:[%s1 + $0x10] sm:$0xff]
    %v32 = vld [vmem:[%s1 + $0x18] sm:$0xff]
    %v33 = vld [vmem:[%s3] sm:$0x1]
    %v35 = vperm.slane %v33, 0
    %vm37 = vcmask 261120
    %v39 = vsel %vm37, %v21, 0
    %v42 = vsel %vm37, %v22, 0
    %v45 = vsel %vm37, %v23, 0
    %v48 = vsel %vm37, %v24, 0
    %v51 = vsel %vm37, %v25, 0
    %v54 = vsel %vm37, %v26, 0
    %v57 = vsel %vm37, %v27, 0
    %v60 = vsel %vm37, %v28, 0
    %62 = vmatpush.msra.mxu0 0.0
    %63 = vmatpush.msra.mxu0 0.0
    %64 = vmatpush.msra.mxu0 0.0
    %65 = vmatpush.msra.mxu0 0.0
    %66 = vmatpush.msra.mxu0 0.0
    %67 = vmatpush.msra.mxu0 0.0
    %68 = vmatpush.msra.mxu0 0.0
    %69 = vmatpush.msra.mxu0 0.0
    %70 = vmatpush.msra.mxu0 0.0
    %71 = vmatpush.msra.mxu0 0.0
    %72 = vmatpush.msra.mxu0 0.0
    %73 = vmatpush.msra.mxu0 0.0
    %74 = vmatpush.msra.mxu0 %v32
    %75 = vmatpush.msra.mxu0 %v31
    %76 = vmatpush.msra.mxu0 %v30
    %77 = vmatpush.msra.mxu0 %v29
    %78 = vmatmul.f32.gmra.mxu0 %v39
    %v79 = vpop.f32.mrf.mxu0
    %v80 = vadd.f32 %v35, %v79
    %81 = vmatmul.f32.gmra.mxu0 %v42
    %v82 = vpop.f32.mrf.mxu0
    %v83 = vadd.f32 %v35, %v82
    %84 = vmatmul.f32.gmra.mxu0 %v45
    %v85 = vpop.f32.mrf.mxu0
    %v86 = vadd.f32 %v35, %v85
    %87 = vmatmul.f32.gmra.mxu0 %v48
    %v88 = vpop.f32.mrf.mxu0
    %v89 = vadd.f32 %v35, %v88
    %90 = vmatmul.f32.gmra.mxu0 %v51
    %v91 = vpop.f32.mrf.mxu0
    %v92 = vadd.f32 %v35, %v91
    %93 = vmatmul.f32.gmra.mxu0 %v54
    %v94 = vpop.f32.mrf.mxu0
    %v95 = vadd.f32 %v35, %v94
    %96 = vmatmul.f32.gmra.mxu0 %v57
    %v97 = vpop.f32.mrf.mxu0
    %v98 = vadd.f32 %v35, %v97
    %99 = vmatmul.f32.gmra.mxu0 %v60
    %v100 = vpop.f32.mrf.mxu0
    %v101 = vadd.f32 %v35, %v100
    %102 = vdwg.mxu0
    %103 = vst [vmem:[#allocation2] sm:$0xff] %v80
    %104 = vst [vmem:[#allocation2 + $0x8] sm:$0xff] %v83
    %105 = vst [vmem:[#allocation2 + $0x10] sm:$0xff] %v86
    %106 = vst [vmem:[#allocation2 + $0x18] sm:$0xff] %v89
    %107 = vst [vmem:[#allocation2 + $0x20] sm:$0xff] %v92
    %108 = vst [vmem:[#allocation2 + $0x28] sm:$0xff] %v95
    %109 = vst [vmem:[#allocation2 + $0x30] sm:$0xff] %v98
    %110 = vst [vmem:[#allocation2 + $0x38] sm:$0xff] %v101
    %v111 = vld [vmem:[%s4] sm:$0x1]
    %v112 = vld [vmem:[#allocation2] sm:$0xff]
    %v113 = vtanh.pop %v112
    %v114 = vmul.f32 %v113, 0.5
    %v115 = vadd.f32 %v114, 0.5
    %v116 = vmul.f32 %v115, 0.0
    %118 = vrot.lane.b32.xlu0 %v113, 64
    %v119 = vpop.permute.xlu0 %118
    %v121 = vmul.f32 %v115, %v119
    %123 = vrot.lane.b32.xlu0 %v121, 32
    %v124 = vpop.permute.xlu0 %123
    %v126 = vadd.f32 %v116, %v124
    %v127 = vtanh.pop %v126
    %129 = vrot.lane.b32.xlu0 %v127, 64
    %v130 = vpop.permute.xlu0 %129
    %v132 = vmul.f32 %v115, %v130
    %v133 = vld [vmem:[%s2] sm:$0xff]
    %v134 = vld [vmem:[%s2 + $0x8] sm:$0xff]
    %v135 = vld [vmem:[%s2 + $0x10] sm:$0xff]
    %v136 = vld [vmem:[%s2 + $0x18] sm:$0xff]
    %v137 = vld [vmem:[%s2 + $0x20] sm:$0xff]
    %v138 = vld [vmem:[%s2 + $0x28] sm:$0xff]
    %v139 = vld [vmem:[%s2 + $0x30] sm:$0xff]
    %v140 = vld [vmem:[%s2 + $0x38] sm:$0xff]
    %142 = vrot.lane.b32.xlu0 %v132, 32
    %v143 = vpop.permute.xlu0 %142
    %v144 = vsel %vm37, %v143, 0
    %146 = vmatpush.msra.mxu0 0.0
    %147 = vmatpush.msra.mxu0 0.0
    %148 = vmatpush.msra.mxu0 0.0
    %149 = vmatpush.msra.mxu0 0.0
    %150 = vmatpush.msra.mxu0 0.0
    %151 = vmatpush.msra.mxu0 0.0
    %152 = vmatpush.msra.mxu0 0.0
    %153 = vmatpush.msra.mxu0 0.0
    %154 = vmatpush.msra.mxu0 0.0
    %155 = vmatpush.msra.mxu0 0.0
    %156 = vmatpush.msra.mxu0 0.0
    %157 = vmatpush.msra.mxu0 0.0
    %158 = vmatpush.msra.mxu0 %v139
    %159 = vmatpush.msra.mxu0 %v137
    %160 = vmatpush.msra.mxu0 %v135
    %161 = vmatpush.msra.mxu0 %v133
    %162 = vmatmul.f32.gmra.mxu0 %v144
    %v163 = vpop.f32.mrf.mxu0
    %v164 = vadd.f32 0.0, %v163
    %165 = vdwg.mxu0
    %166 = vmatpush.msra.mxu0 0.0
    %167 = vmatpush.msra.mxu0 0.0
    %168 = vmatpush.msra.mxu0 0.0
    %169 = vmatpush.msra.mxu0 0.0
    %170 = vmatpush.msra.mxu0 0.0
    %171 = vmatpush.msra.mxu0 0.0
    %172 = vmatpush.msra.mxu0 0.0
    %173 = vmatpush.msra.mxu0 0.0
    %174 = vmatpush.msra.mxu0 0.0
    %175 = vmatpush.msra.mxu0 0.0
    %176 = vmatpush.msra.mxu0 0.0
    %177 = vmatpush.msra.mxu0 0.0
    %178 = vmatpush.msra.mxu0 %v140
    %179 = vmatpush.msra.mxu0 %v138
    %180 = vmatpush.msra.mxu0 %v136
    %181 = vmatpush.msra.mxu0 %v134
    %182 = vmatmul.f32.gmra.mxu0 %v144
    %v183 = vpop.f32.mrf.mxu0
    %v184 = vadd.f32 0.0, %v183
    %185 = vdwg.mxu0
    %v187 = vperm.slane %v111, 0
    %v189 = vadd.f32 %v184, %v187
    %190 = vst [vmem:[#allocation3] sm:$0xff] %v189
    %v191 = vld [vmem:[#allocation2 + $0x8] sm:$0xff]
    %v192 = vadd.f32 %v191, %v164
    %v193 = vtanh.pop %v192
    %v194 = vmul.f32 %v193, 0.5
    %v195 = vadd.f32 %v194, 0.5
    %v196 = vmul.f32 %v195, %v126
    %198 = vrot.lane.b32.xlu0 %v193, 64
    %v199 = vpop.permute.xlu0 %198
    %v201 = vmul.f32 %v195, %v199
    %203 = vrot.lane.b32.xlu0 %v201, 32
    %v204 = vpop.permute.xlu0 %203
    %v206 = vadd.f32 %v196, %v204
    %v207 = vtanh.pop %v206
    %209 = vrot.lane.b32.xlu0 %v207, 64
    %v210 = vpop.permute.xlu0 %209
    %v212 = vmul.f32 %v195, %v210
    %v213 = vld [vmem:[%s2] sm:$0xff]
    %v214 = vld [vmem:[%s2 + $0x8] sm:$0xff]
    %v215 = vld [vmem:[%s2 + $0x10] sm:$0xff]
    %v216 = vld [vmem:[%s2 + $0x18] sm:$0xff]
    %v217 = vld [vmem:[%s2 + $0x20] sm:$0xff]
    %v218 = vld [vmem:[%s2 + $0x28] sm:$0xff]
    %v219 = vld [vmem:[%s2 + $0x30] sm:$0xff]
    %v220 = vld [vmem:[%s2 + $0x38] sm:$0xff]
    %222 = vrot.lane.b32.xlu0 %v212, 32
    %v223 = vpop.permute.xlu0 %222
    %v224 = vsel %vm37, %v223, 0
    %226 = vmatpush.msra.mxu0 0.0
    %227 = vmatpush.msra.mxu0 0.0
    %228 = vmatpush.msra.mxu0 0.0
    %229 = vmatpush.msra.mxu0 0.0
    %230 = vmatpush.msra.mxu0 0.0
    %231 = vmatpush.msra.mxu0 0.0
    %232 = vmatpush.msra.mxu0 0.0
    %233 = vmatpush.msra.mxu0 0.0
    %234 = vmatpush.msra.mxu0 0.0
    %235 = vmatpush.msra.mxu0 0.0
    %236 = vmatpush.msra.mxu0 0.0
    %237 = vmatpush.msra.mxu0 0.0
    %238 = vmatpush.msra.mxu0 %v219
    %239 = vmatpush.msra.mxu0 %v217
    %240 = vmatpush.msra.mxu0 %v215
    %241 = vmatpush.msra.mxu0 %v213
    %242 = vmatmul.f32.gmra.mxu0 %v224
    %v243 = vpop.f32.mrf.mxu0
    %v244 = vadd.f32 0.0, %v243
    %245 = vdwg.mxu0
    %246 = vmatpush.msra.mxu0 0.0
    %247 = vmatpush.msra.mxu0 0.0
    %248 = vmatpush.msra.mxu0 0.0
    %249 = vmatpush.msra.mxu0 0.0
    %250 = vmatpush.msra.mxu0 0.0
    %251 = vmatpush.msra.mxu0 0.0
    %252 = vmatpush.msra.mxu0 0.0
    %253 = vmatpush.msra.mxu0 0.0
    %254 = vmatpush.msra.mxu0 0.0
    %255 = vmatpush.msra.mxu0 0.0
    %256 = vmatpush.msra.mxu0 0.0
    %257 = vmatpush.msra.mxu0 0.0
    %258 = vmatpush.msra.mxu0 %v220
    %259 = vmatpush.msra.mxu0 %v218
    %260 = vmatpush.msra.mxu0 %v216
    %261 = vmatpush.msra.mxu0 %v214
    %262 = vmatmul.f32.gmra.mxu0 %v224
    %v263 = vpop.f32.mrf.mxu0
    %v264 = vadd.f32 0.0, %v263
    %265 = vdwg.mxu0
    %v266 = vadd.f32 %v264, %v187
    %267 = vst [vmem:[#allocation3 + $0x8] sm:$0xff] %v266
    %v268 = vld [vmem:[#allocation2 + $0x10] sm:$0xff]
    %v269 = vadd.f32 %v268, %v244
    %v270 = vtanh.pop %v269
    %v271 = vmul.f32 %v270, 0.5
    %v272 = vadd.f32 %v271, 0.5
    %v273 = vmul.f32 %v272, %v206
    %275 = vrot.lane.b32.xlu0 %v270, 64
    %v276 = vpop.permute.xlu0 %275
    %v278 = vmul.f32 %v272, %v276
    %280 = vrot.lane.b32.xlu0 %v278, 32
    %v281 = vpop.permute.xlu0 %280
    %v283 = vadd.f32 %v273, %v281
    %v284 = vtanh.pop %v283
    %286 = vrot.lane.b32.xlu0 %v284, 64
    %v287 = vpop.permute.xlu0 %286
    %v289 = vmul.f32 %v272, %v287
    %v290 = vld [vmem:[%s2] sm:$0xff]
    %v291 = vld [vmem:[%s2 + $0x8] sm:$0xff]
    %v292 = vld [vmem:[%s2 + $0x10] sm:$0xff]
    %v293 = vld [vmem:[%s2 + $0x18] sm:$0xff]
    %v294 = vld [vmem:[%s2 + $0x20] sm:$0xff]
    %v295 = vld [vmem:[%s2 + $0x28] sm:$0xff]
    %v296 = vld [vmem:[%s2 + $0x30] sm:$0xff]
    %v297 = vld [vmem:[%s2 + $0x38] sm:$0xff]
    %299 = vrot.lane.b32.xlu0 %v289, 32
    %v300 = vpop.permute.xlu0 %299
    %v301 = vsel %vm37, %v300, 0
    %303 = vmatpush.msra.mxu0 0.0
    %304 = vmatpush.msra.mxu0 0.0
    %305 = vmatpush.msra.mxu0 0.0
    %306 = vmatpush.msra.mxu0 0.0
    %307 = vmatpush.msra.mxu0 0.0
    %308 = vmatpush.msra.mxu0 0.0
    %309 = vmatpush.msra.mxu0 0.0
    %310 = vmatpush.msra.mxu0 0.0
    %311 = vmatpush.msra.mxu0 0.0
    %312 = vmatpush.msra.mxu0 0.0
    %313 = vmatpush.msra.mxu0 0.0
    %314 = vmatpush.msra.mxu0 0.0
    %315 = vmatpush.msra.mxu0 %v296
    %316 = vmatpush.msra.mxu0 %v294
    %317 = vmatpush.msra.mxu0 %v292
    %318 = vmatpush.msra.mxu0 %v290
    %319 = vmatmul.f32.gmra.mxu0 %v301
    %v320 = vpop.f32.mrf.mxu0
    %v321 = vadd.f32 0.0, %v320
    %322 = vdwg.mxu0
    %323 = vmatpush.msra.mxu0 0.0
    %324 = vmatpush.msra.mxu0 0.0
    %325 = vmatpush.msra.mxu0 0.0
    %326 = vmatpush.msra.mxu0 0.0
    %327 = vmatpush.msra.mxu0 0.0
    %328 = vmatpush.msra.mxu0 0.0
    %329 = vmatpush.msra.mxu0 0.0
    %330 = vmatpush.msra.mxu0 0.0
    %331 = vmatpush.msra.mxu0 0.0
    %332 = vmatpush.msra.mxu0 0.0
    %333 = vmatpush.msra.mxu0 0.0
    %334 = vmatpush.msra.mxu0 0.0
    %335 = vmatpush.msra.mxu0 %v297
    %336 = vmatpush.msra.mxu0 %v295
    %337 = vmatpush.msra.mxu0 %v293
    %338 = vmatpush.msra.mxu0 %v291
    %339 = vmatmul.f32.gmra.mxu0 %v301
    %v340 = vpop.f32.mrf.mxu0
    %v341 = vadd.f32 0.0, %v340
    %342 = vdwg.mxu0
    %v343 = vadd.f32 %v341, %v187
    %344 = vst [vmem:[#allocation3 + $0x10] sm:$0xff] %v343
    %v345 = vld [vmem:[#allocation2 + $0x18] sm:$0xff]
    %v346 = vadd.f32 %v345, %v321
    %v347 = vtanh.pop %v346
    %v348 = vmul.f32 %v347, 0.5
    %v349 = vadd.f32 %v348, 0.5
    %v350 = vmul.f32 %v349, %v283
    %352 = vrot.lane.b32.xlu0 %v347, 64
    %v353 = vpop.permute.xlu0 %352
    %v355 = vmul.f32 %v349, %v353
    %357 = vrot.lane.b32.xlu0 %v355, 32
    %v358 = vpop.permute.xlu0 %357
    %v360 = vadd.f32 %v350, %v358
    %v361 = vtanh.pop %v360
    %363 = vrot.lane.b32.xlu0 %v361, 64
    %v364 = vpop.permute.xlu0 %363
    %v366 = vmul.f32 %v349, %v364
    %v367 = vld [vmem:[%s2] sm:$0xff]
    %v368 = vld [vmem:[%s2 + $0x8] sm:$0xff]
    %v369 = vld [vmem:[%s2 + $0x10] sm:$0xff]
    %v370 = vld [vmem:[%s2 + $0x18] sm:$0xff]
    %v371 = vld [vmem:[%s2 + $0x20] sm:$0xff]
    %v372 = vld [vmem:[%s2 + $0x28] sm:$0xff]
    %v373 = vld [vmem:[%s2 + $0x30] sm:$0xff]
    %v374 = vld [vmem:[%s2 + $0x38] sm:$0xff]
    %376 = vrot.lane.b32.xlu0 %v366, 32
    %v377 = vpop.permute.xlu0 %376
    %v378 = vsel %vm37, %v377, 0
    %380 = vmatpush.msra.mxu0 0.0
    %381 = vmatpush.msra.mxu0 0.0
    %382 = vmatpush.msra.mxu0 0.0
    %383 = vmatpush.msra.mxu0 0.0
    %384 = vmatpush.msra.mxu0 0.0
    %385 = vmatpush.msra.mxu0 0.0
    %386 = vmatpush.msra.mxu0 0.0
    %387 = vmatpush.msra.mxu0 0.0
    %388 = vmatpush.msra.mxu0 0.0
    %389 = vmatpush.msra.mxu0 0.0
    %390 = vmatpush.msra.mxu0 0.0
    %391 = vmatpush.msra.mxu0 0.0
    %392 = vmatpush.msra.mxu0 %v373
    %393 = vmatpush.msra.mxu0 %v371
    %394 = vmatpush.msra.mxu0 %v369
    %395 = vmatpush.msra.mxu0 %v367
    %396 = vmatmul.f32.gmra.mxu0 %v378
    %v397 = vpop.f32.mrf.mxu0
    %v398 = vadd.f32 0.0, %v397
    %399 = vdwg.mxu0
    %400 = vmatpush.msra.mxu0 0.0
    %401 = vmatpush.msra.mxu0 0.0
    %402 = vmatpush.msra.mxu0 0.0
    %403 = vmatpush.msra.mxu0 0.0
    %404 = vmatpush.msra.mxu0 0.0
    %405 = vmatpush.msra.mxu0 0.0
    %406 = vmatpush.msra.mxu0 0.0
    %407 = vmatpush.msra.mxu0 0.0
    %408 = vmatpush.msra.mxu0 0.0
    %409 = vmatpush.msra.mxu0 0.0
    %410 = vmatpush.msra.mxu0 0.0
    %411 = vmatpush.msra.mxu0 0.0
    %412 = vmatpush.msra.mxu0 %v374
    %413 = vmatpush.msra.mxu0 %v372
    %414 = vmatpush.msra.mxu0 %v370
    %415 = vmatpush.msra.mxu0 %v368
    %416 = vmatmul.f32.gmra.mxu0 %v378
    %v417 = vpop.f32.mrf.mxu0
    %v418 = vadd.f32 0.0, %v417
    %419 = vdwg.mxu0
    %v420 = vadd.f32 %v418, %v187
    %421 = vst [vmem:[#allocation3 + $0x18] sm:$0xff] %v420
    %v422 = vld [vmem:[#allocation2 + $0x20] sm:$0xff]
    %v423 = vadd.f32 %v422, %v398
    %v424 = vtanh.pop %v423
    %v425 = vmul.f32 %v424, 0.5
    %v426 = vadd.f32 %v425, 0.5
    %v427 = vmul.f32 %v426, %v360
    %429 = vrot.lane.b32.xlu0 %v424, 64
    %v430 = vpop.permute.xlu0 %429
    %v432 = vmul.f32 %v426, %v430
    %434 = vrot.lane.b32.xlu0 %v432, 32
    %v435 = vpop.permute.xlu0 %434
    %v437 = vadd.f32 %v427, %v435
    %v438 = vtanh.pop %v437
    %440 = vrot.lane.b32.xlu0 %v438, 64
    %v441 = vpop.permute.xlu0 %440
    %v443 = vmul.f32 %v426, %v441
    %v444 = vld [vmem:[%s2] sm:$0xff]
    %v445 = vld [vmem:[%s2 + $0x8] sm:$0xff]
    %v446 = vld [vmem:[%s2 + $0x10] sm:$0xff]
    %v447 = vld [vmem:[%s2 + $0x18] sm:$0xff]
    %v448 = vld [vmem:[%s2 + $0x20] sm:$0xff]
    %v449 = vld [vmem:[%s2 + $0x28] sm:$0xff]
    %v450 = vld [vmem:[%s2 + $0x30] sm:$0xff]
    %v451 = vld [vmem:[%s2 + $0x38] sm:$0xff]
    %453 = vrot.lane.b32.xlu0 %v443, 32
    %v454 = vpop.permute.xlu0 %453
    %v455 = vsel %vm37, %v454, 0
    %457 = vmatpush.msra.mxu0 0.0
    %458 = vmatpush.msra.mxu0 0.0
    %459 = vmatpush.msra.mxu0 0.0
    %460 = vmatpush.msra.mxu0 0.0
    %461 = vmatpush.msra.mxu0 0.0
    %462 = vmatpush.msra.mxu0 0.0
    %463 = vmatpush.msra.mxu0 0.0
    %464 = vmatpush.msra.mxu0 0.0
    %465 = vmatpush.msra.mxu0 0.0
    %466 = vmatpush.msra.mxu0 0.0
    %467 = vmatpush.msra.mxu0 0.0
    %468 = vmatpush.msra.mxu0 0.0
    %469 = vmatpush.msra.mxu0 %v450
    %470 = vmatpush.msra.mxu0 %v448
    %471 = vmatpush.msra.mxu0 %v446
    %472 = vmatpush.msra.mxu0 %v444
    %473 = vmatmul.f32.gmra.mxu0 %v455
    %v474 = vpop.f32.mrf.mxu0
    %v475 = vadd.f32 0.0, %v474
    %476 = vdwg.mxu0
    %477 = vmatpush.msra.mxu0 0.0
    %478 = vmatpush.msra.mxu0 0.0
    %479 = vmatpush.msra.mxu0 0.0
    %480 = vmatpush.msra.mxu0 0.0
    %481 = vmatpush.msra.mxu0 0.0
    %482 = vmatpush.msra.mxu0 0.0
    %483 = vmatpush.msra.mxu0 0.0
    %484 = vmatpush.msra.mxu0 0.0
    %485 = vmatpush.msra.mxu0 0.0
    %486 = vmatpush.msra.mxu0 0.0
    %487 = vmatpush.msra.mxu0 0.0
    %488 = vmatpush.msra.mxu0 0.0
    %489 = vmatpush.msra.mxu0 %v451
    %490 = vmatpush.msra.mxu0 %v449
    %491 = vmatpush.msra.mxu0 %v447
    %492 = vmatpush.msra.mxu0 %v445
    %493 = vmatmul.f32.gmra.mxu0 %v455
    %v494 = vpop.f32.mrf.mxu0
    %v495 = vadd.f32 0.0, %v494
    %496 = vdwg.mxu0
    %v497 = vadd.f32 %v495, %v187
    %498 = vst [vmem:[#allocation3 + $0x20] sm:$0xff] %v497
    %v499 = vld [vmem:[#allocation2 + $0x28] sm:$0xff]
    %v500 = vadd.f32 %v499, %v475
    %v501 = vtanh.pop %v500
    %v502 = vmul.f32 %v501, 0.5
    %v503 = vadd.f32 %v502, 0.5
    %v504 = vmul.f32 %v503, %v437
    %506 = vrot.lane.b32.xlu0 %v501, 64
    %v507 = vpop.permute.xlu0 %506
    %v509 = vmul.f32 %v503, %v507
    %511 = vrot.lane.b32.xlu0 %v509, 32
    %v512 = vpop.permute.xlu0 %511
    %v514 = vadd.f32 %v504, %v512
    %v515 = vtanh.pop %v514
    %517 = vrot.lane.b32.xlu0 %v515, 64
    %v518 = vpop.permute.xlu0 %517
    %v520 = vmul.f32 %v503, %v518
    %v521 = vld [vmem:[%s2] sm:$0xff]
    %v522 = vld [vmem:[%s2 + $0x8] sm:$0xff]
    %v523 = vld [vmem:[%s2 + $0x10] sm:$0xff]
    %v524 = vld [vmem:[%s2 + $0x18] sm:$0xff]
    %v525 = vld [vmem:[%s2 + $0x20] sm:$0xff]
    %v526 = vld [vmem:[%s2 + $0x28] sm:$0xff]
    %v527 = vld [vmem:[%s2 + $0x30] sm:$0xff]
    %v528 = vld [vmem:[%s2 + $0x38] sm:$0xff]
    %530 = vrot.lane.b32.xlu0 %v520, 32
    %v531 = vpop.permute.xlu0 %530
    %v532 = vsel %vm37, %v531, 0
    %534 = vmatpush.msra.mxu0 0.0
    %535 = vmatpush.msra.mxu0 0.0
    %536 = vmatpush.msra.mxu0 0.0
    %537 = vmatpush.msra.mxu0 0.0
    %538 = vmatpush.msra.mxu0 0.0
    %539 = vmatpush.msra.mxu0 0.0
    %540 = vmatpush.msra.mxu0 0.0
    %541 = vmatpush.msra.mxu0 0.0
    %542 = vmatpush.msra.mxu0 0.0
    %543 = vmatpush.msra.mxu0 0.0
    %544 = vmatpush.msra.mxu0 0.0
    %545 = vmatpush.msra.mxu0 0.0
    %546 = vmatpush.msra.mxu0 %v527
    %547 = vmatpush.msra.mxu0 %v525
    %548 = vmatpush.msra.mxu0 %v523
    %549 = vmatpush.msra.mxu0 %v521
    %550 = vmatmul.f32.gmra.mxu0 %v532
    %v551 = vpop.f32.mrf.mxu0
    %v552 = vadd.f32 0.0, %v551
    %553 = vdwg.mxu0
    %554 = vmatpush.msra.mxu0 0.0
    %555 = vmatpush.msra.mxu0 0.0
    %556 = vmatpush.msra.mxu0 0.0
    %557 = vmatpush.msra.mxu0 0.0
    %558 = vmatpush.msra.mxu0 0.0
    %559 = vmatpush.msra.mxu0 0.0
    %560 = vmatpush.msra.mxu0 0.0
    %561 = vmatpush.msra.mxu0 0.0
    %562 = vmatpush.msra.mxu0 0.0
    %563 = vmatpush.msra.mxu0 0.0
    %564 = vmatpush.msra.mxu0 0.0
    %565 = vmatpush.msra.mxu0 0.0
    %566 = vmatpush.msra.mxu0 %v528
    %567 = vmatpush.msra.mxu0 %v526
    %568 = vmatpush.msra.mxu0 %v524
    %569 = vmatpush.msra.mxu0 %v522
    %570 = vmatmul.f32.gmra.mxu0 %v532
    %v571 = vpop.f32.mrf.mxu0
    %v572 = vadd.f32 0.0, %v571
    %573 = vdwg.mxu0
    %v574 = vadd.f32 %v572, %v187
    %575 = vst [vmem:[#allocation3 + $0x28] sm:$0xff] %v574
    %v576 = vld [vmem:[#allocation2 + $0x30] sm:$0xff]
    %v577 = vadd.f32 %v576, %v552
    %v578 = vtanh.pop %v577
    %v579 = vmul.f32 %v578, 0.5
    %v580 = vadd.f32 %v579, 0.5
    %v581 = vmul.f32 %v580, %v514
    %583 = vrot.lane.b32.xlu0 %v578, 64
    %v584 = vpop.permute.xlu0 %583
    %v586 = vmul.f32 %v580, %v584
    %588 = vrot.lane.b32.xlu0 %v586, 32
    %v589 = vpop.permute.xlu0 %588
    %v591 = vadd.f32 %v581, %v589
    %v592 = vtanh.pop %v591
    %594 = vrot.lane.b32.xlu0 %v592, 64
    %v595 = vpop.permute.xlu0 %594
    %v597 = vmul.f32 %v580, %v595
    %v598 = vld [vmem:[%s2] sm:$0xff]
    %v599 = vld [vmem:[%s2 + $0x8] sm:$0xff]
    %v600 = vld [vmem:[%s2 + $0x10] sm:$0xff]
    %v601 = vld [vmem:[%s2 + $0x18] sm:$0xff]
    %v602 = vld [vmem:[%s2 + $0x20] sm:$0xff]
    %v603 = vld [vmem:[%s2 + $0x28] sm:$0xff]
    %v604 = vld [vmem:[%s2 + $0x30] sm:$0xff]
    %v605 = vld [vmem:[%s2 + $0x38] sm:$0xff]
    %607 = vrot.lane.b32.xlu0 %v597, 32
    %v608 = vpop.permute.xlu0 %607
    %v609 = vsel %vm37, %v608, 0
    %611 = vmatpush.msra.mxu0 0.0
    %612 = vmatpush.msra.mxu0 0.0
    %613 = vmatpush.msra.mxu0 0.0
    %614 = vmatpush.msra.mxu0 0.0
    %615 = vmatpush.msra.mxu0 0.0
    %616 = vmatpush.msra.mxu0 0.0
    %617 = vmatpush.msra.mxu0 0.0
    %618 = vmatpush.msra.mxu0 0.0
    %619 = vmatpush.msra.mxu0 0.0
    %620 = vmatpush.msra.mxu0 0.0
    %621 = vmatpush.msra.mxu0 0.0
    %622 = vmatpush.msra.mxu0 0.0
    %623 = vmatpush.msra.mxu0 %v604
    %624 = vmatpush.msra.mxu0 %v602
    %625 = vmatpush.msra.mxu0 %v600
    %626 = vmatpush.msra.mxu0 %v598
    %627 = vmatmul.f32.gmra.mxu0 %v609
    %v628 = vpop.f32.mrf.mxu0
    %v629 = vadd.f32 0.0, %v628
    %630 = vdwg.mxu0
    %631 = vmatpush.msra.mxu0 0.0
    %632 = vmatpush.msra.mxu0 0.0
    %633 = vmatpush.msra.mxu0 0.0
    %634 = vmatpush.msra.mxu0 0.0
    %635 = vmatpush.msra.mxu0 0.0
    %636 = vmatpush.msra.mxu0 0.0
    %637 = vmatpush.msra.mxu0 0.0
    %638 = vmatpush.msra.mxu0 0.0
    %639 = vmatpush.msra.mxu0 0.0
    %640 = vmatpush.msra.mxu0 0.0
    %641 = vmatpush.msra.mxu0 0.0
    %642 = vmatpush.msra.mxu0 0.0
    %643 = vmatpush.msra.mxu0 %v605
    %644 = vmatpush.msra.mxu0 %v603
    %645 = vmatpush.msra.mxu0 %v601
    %646 = vmatpush.msra.mxu0 %v599
    %647 = vmatmul.f32.gmra.mxu0 %v609
    %v648 = vpop.f32.mrf.mxu0
    %v649 = vadd.f32 0.0, %v648
    %650 = vdwg.mxu0
    %v651 = vadd.f32 %v649, %v187
    %652 = vst [vmem:[#allocation3 + $0x30] sm:$0xff] %v651
    %v653 = vld [vmem:[#allocation2 + $0x38] sm:$0xff]
    %v654 = vadd.f32 %v653, %v629
    %v655 = vtanh.pop %v654
    %v656 = vmul.f32 %v655, 0.5
    %v657 = vadd.f32 %v656, 0.5
    %v658 = vmul.f32 %v657, %v591
    %660 = vrot.lane.b32.xlu0 %v655, 64
    %v661 = vpop.permute.xlu0 %660
    %v663 = vmul.f32 %v657, %v661
    %665 = vrot.lane.b32.xlu0 %v663, 32
    %v666 = vpop.permute.xlu0 %665
    %v668 = vadd.f32 %v658, %v666
    %v669 = vtanh.pop %v668
    %671 = vrot.lane.b32.xlu0 %v669, 64
    %v672 = vpop.permute.xlu0 %671
    %v674 = vmul.f32 %v657, %v672
    %v675 = vld [vmem:[%s2 + $0x8] sm:$0xff]
    %v676 = vld [vmem:[%s2 + $0x18] sm:$0xff]
    %v677 = vld [vmem:[%s2 + $0x28] sm:$0xff]
    %v678 = vld [vmem:[%s2 + $0x38] sm:$0xff]
    %680 = vrot.lane.b32.xlu0 %v674, 32
    %v681 = vpop.permute.xlu0 %680
    %v682 = vsel %vm37, %v681, 0
    %684 = vmatpush.msra.mxu0 0.0
    %685 = vmatpush.msra.mxu0 0.0
    %686 = vmatpush.msra.mxu0 0.0
    %687 = vmatpush.msra.mxu0 0.0
    %688 = vmatpush.msra.mxu0 0.0
    %689 = vmatpush.msra.mxu0 0.0
    %690 = vmatpush.msra.mxu0 0.0
    %691 = vmatpush.msra.mxu0 0.0
    %692 = vmatpush.msra.mxu0 0.0
    %693 = vmatpush.msra.mxu0 0.0
    %694 = vmatpush.msra.mxu0 0.0
    %695 = vmatpush.msra.mxu0 0.0
    %696 = vmatpush.msra.mxu0 %v678
    %697 = vmatpush.msra.mxu0 %v677
    %698 = vmatpush.msra.mxu0 %v676
    %699 = vmatpush.msra.mxu0 %v675
    %700 = vmatmul.f32.gmra.mxu0 %v682
    %v701 = vpop.f32.mrf.mxu0
    %v702 = vadd.f32 0.0, %v701
    %703 = vdwg.mxu0
    %v704 = vadd.f32 %v702, %v187
    %705 = vst [vmem:[#allocation3 + $0x38] sm:$0xff] %v704
    // Predicated region
    $region22: #{tpu_custom_call.1} parent=1 // pred_check
      _
    $region23: #{tpu_custom_call.1} parent=1 // pred_check_branch
      %707 = sbr.rel (0) target = $region25
    $region24: #{tpu_custom_call.1} parent=1 // pred_region
      %709 = vsyncadd [#allocation4], 0
      %s710 = sshll.u32 [#allocation3], 4
      %s711 = int_to_ptr.vmem [resolvable:$true] %s710
      %s712 = sshll.u32 %s5, 4
      %s713 = int_to_ptr.hbm [resolvable:$true] %s712
      %718 = dma.vmem_to_hbm [thread:$0]  %s711, 1024, %s713, [#allocation4], 128, 128, 8
    $region25: #{tpu_custom_call.1} parent=1 // pred_fallthru
      _
    // Predicated region
    $region26: #{tpu_custom_call.1} parent=1 // pred_check
      _
    $region27: #{tpu_custom_call.1} parent=1 // pred_check_branch
      %720 = sbr.rel (0) target = $region29
    $region28: #{tpu_custom_call.1} parent=1 // pred_region
      %722 = dma.done [#allocation4], 1024
    $region29: #{tpu_custom_call.1} parent=1 // pred_fallthru
      _
    %723 = vsyncpa [#allocation4], 1

</llo_original>
